<compile_context>
chip_gen: v6e
topology: v6e:2x2x1
jax: 0.10.0
libtpu: 0.0.40
codegen_flags: <defaults>
</compile_context>

<pallas_src>
import functools
import math

import jax
import jax.numpy as jnp
from jax import lax
from jax.experimental import pallas as pl
from jax.experimental.pallas import tpu as pltpu


def _round_up(x, m):
    return (x + m - 1) // m * m


def _cdiv(a, b):
    return -(-a // b)


def _neumf_kernel(n_layers, mf_dim, apply_sigmoid, u_ref, i_ref, *rest):
    """rest = (W1, b1, W2, b2, ..., Wn, bn, final_w, final_b[SMEM], out_ref)."""
    out_ref = rest[-1]           # (1, 1, TB) f32, lane-dense logits slab
    bf_ref = rest[-2]            # (1, 1) f32 scalar in SMEM
    wf_ref = rest[-3]            # (1, mf_dim + mlp_last) f32, VMEM-resident
    layer_params = rest[:-3]     # (W_l, b_l) pairs, VMEM-resident

    f32 = jnp.float32
    u = u_ref[...]               # (TB, mf_dim + half) bf16: [mf_embed || mlp_embed]
    v = i_ref[...]

    # --- GMF branch: elementwise product on the VPU, in f32 -------------------
    xmf = u[:, :mf_dim].astype(f32) * v[:, :mf_dim].astype(f32)     # (TB, mf_dim)

    # --- MLP branch: in-kernel lane concat -> one K=layer0 dot per layer ------
    h = jnp.concatenate([u[:, mf_dim:], v[:, mf_dim:]], axis=-1)    # (TB, layer0) bf16
    for l in range(n_layers):
        w_ref = layer_params[2 * l]
        b_ref = layer_params[2 * l + 1]
        h = jnp.dot(h.astype(w_ref.dtype), w_ref[...],
                    preferred_element_type=f32) + b_ref[...]
        h = jnp.maximum(h, 0.0)

    # --- Final layer (fused): logits[t] = final_w . [xmf_t || h_t] + final_b --
    # Single NT matmul (contract last dims) -> result is (1, TB), i.e. already
    # lane-dense: no (TB, 1) masked stores and no sublane->lane relayout.
    cat = jnp.concatenate([xmf, h], axis=-1).astype(jnp.bfloat16)   # (TB, F)
    logits = lax.dot_general(
        wf_ref[...].astype(jnp.bfloat16), cat,
        (((1,), (1,)), ((), ())), preferred_element_type=f32)       # (1, TB)
    logits = logits + bf_ref[0, 0]
    if apply_sigmoid:
        logits = jax.nn.sigmoid(logits)
    out_ref[...] = logits.reshape(out_ref.shape).astype(out_ref.dtype)


def neumf_pallas(params, user, item, sigmoid=True, block_rows=2048):
    mf_dim = params["mf_dim"]
    user_tbl, item_tbl = params["user_embed"], params["item_embed"]
    mlp_w, mlp_b = params["mlp_w"], params["mlp_b"]
    n_layers = len(mlp_w)
    feat = user_tbl.shape[1]                       # mf_dim + mlp_layer_sizes[0]//2

    batch = user.shape[0]
    b8 = _round_up(batch, 8)
    tb = min(_round_up(block_rows, 8), b8)         # always a multiple of 8
    # v7x has 2 TensorCores: keep >= 2 steps on the "parallel" axis when the
    # batch allows it so both cores get work.
    if _cdiv(b8, tb) < 2 and b8 >= 16:
        tb = max(8, (b8 // 2) // 8 * 8)
    b_pad = _round_up(batch, tb)
    n_tiles = b_pad // tb
    assert b_pad % tb == 0 and tb % 8 == 0

    if b_pad != batch:
        pad = jnp.zeros((b_pad - batch,), dtype=user.dtype)
        user = jnp.concatenate([user, pad])
        item = jnp.concatenate([item, pad])

    # --- glue (plain JAX): one gather per fused table (2 instead of 4) --------
    # TODO(synk): pull the gathers in-kernel (PrefetchScalarGridSpec indices in
    # SMEM + pl.ANY HBM tables + per-tile DMA row gather) to remove the
    # gather -> HBM -> kernel round trip of the activations entirely.
    xu = jnp.take(user_tbl, user, axis=0)          # (b_pad, feat) bf16
    xi = jnp.take(item_tbl, item, axis=0)

    weights = []
    for w, b in zip(mlp_w, mlp_b):
        weights += [w, b]
    weights.append(params["final_w"])

    # Streamed activations: deeper buffering only when there are enough steps.
    if n_tiles >= 3:
        act_specs = [pl.BlockSpec((tb, feat), lambda i: (i, 0),
                                  pipeline_mode=pl.Buffered(3)) for _ in range(2)]
    else:
        act_specs = [pl.BlockSpec((tb, feat), lambda i: (i, 0)) for _ in range(2)]
    # Weights/biases: constant index_map -> VMEM-resident, no re-DMA per step.
    weight_specs = [pl.BlockSpec(w.shape, lambda i: (0, 0)) for w in weights]
    smem_spec = pl.BlockSpec(memory_space=pltpu.MemorySpace.SMEM)   # final bias

    kernel = functools.partial(_neumf_kernel, n_layers, mf_dim, sigmoid)

    out = pl.pallas_call(
        kernel,
        out_shape=jax.ShapeDtypeStruct((n_tiles, 1, tb), jnp.float32),
        grid=(n_tiles,),
        in_specs=act_specs + weight_specs + [smem_spec],
        # Lane-dense output slab: one (1, tb) row of logits per grid step.
        out_specs=pl.BlockSpec((1, 1, tb), lambda i: (i, 0, 0)),
        compiler_params=pltpu.CompilerParams(
            dimension_semantics=("parallel",),
            vmem_limit_bytes=32 * 1024 * 1024),
    )(xu, xi, *weights, params["final_b"])

    return out.reshape(b_pad)[:batch].reshape(batch, 1)


def neumf_reference(params, user, item, sigmoid=True):
    """Pure-JAX reference (same stored params, f32 math) for correctness check."""
    f32 = jnp.float32
    mf_dim = params["mf_dim"]
    u = jnp.take(params["user_embed"], user, axis=0).astype(f32)
    v = jnp.take(params["item_embed"], item, axis=0).astype(f32)
    xmf = u[:, :mf_dim] * v[:, :mf_dim]
    h = jnp.concatenate([u[:, mf_dim:], v[:, mf_dim:]], axis=1)
    for w, b in zip(params["mlp_w"], params["mlp_b"]):
        h = jnp.maximum(h @ w.astype(f32) + b, 0.0)
    cat = jnp.concatenate([xmf, h], axis=1)
    x = cat @ params["final_w"].astype(f32).T + params["final_b"]
    return jax.nn.sigmoid(x) if sigmoid else x


def init_params(key, nb_users, nb_items, mf_dim, mlp_layer_sizes):
    """Deterministic synthetic init mirroring the PyTorch module's scheme.

    The MF and MLP embedding tables are fused per side into one
    [n, mf_dim + mlp_layer_sizes[0]//2] bf16 table ([:, :mf_dim] = MF part,
    [:, mf_dim:] = MLP part), halving the gather count and streamed-input DMA
    descriptors.  MLP weights are bf16; biases and the final layer stay f32.
    """
    # TODO(synk): on v7x, optionally store the embedding tables in fp8 with an
    # in-kernel dequant scale to halve the gather/stream bytes again.
    assert mlp_layer_sizes[0] % 2 == 0
    half = mlp_layer_sizes[0] // 2
    keys = iter(jax.random.split(key, 32))
    bf16 = jnp.bfloat16
    p = {"mf_dim": mf_dim}
    # Embeddings: normal(0, 0.01), fused [MF || MLP] per side.
    p["user_embed"] = (0.01 * jax.random.normal(
        next(keys), (nb_users, mf_dim + half), jnp.float32)).astype(bf16)
    p["item_embed"] = (0.01 * jax.random.normal(
        next(keys), (nb_items, mf_dim + half), jnp.float32)).astype(bf16)
    # MLP layers: Glorot-uniform weights, default-uniform biases.
    mlp_w, mlp_b = [], []
    for i in range(1, len(mlp_layer_sizes)):
        fan_in, fan_out = mlp_layer_sizes[i - 1], mlp_layer_sizes[i]
        wlim = math.sqrt(6.0 / (fan_in + fan_out))
        blim = 1.0 / math.sqrt(fan_in)
        mlp_w.append(jax.random.uniform(
            next(keys), (fan_in, fan_out), jnp.float32, -wlim, wlim).astype(bf16))
        mlp_b.append(jax.random.uniform(
            next(keys), (1, fan_out), jnp.float32, -blim, blim))
    p["mlp_w"], p["mlp_b"] = mlp_w, mlp_b
    # Final layer: LeCun-uniform Linear(mf_dim + mlp_last, 1) on concat([xmf, xmlp]).
    fan_in = mf_dim + mlp_layer_sizes[-1]
    wlim = math.sqrt(3.0 / fan_in)
    blim = 1.0 / math.sqrt(fan_in)
    p["final_w"] = jax.random.uniform(
        next(keys), (1, fan_in), jnp.float32, -wlim, wlim)     # [1, mf_dim + last]
    p["final_b"] = jax.random.uniform(
        next(keys), (1, 1), jnp.float32, -blim, blim)
    return p


if __name__ == "__main__":
    nb_users, nb_items = 32, 48
    mf_dim = 8
    mlp_layer_sizes = [64, 32, 16, 8]
    batch = 12                     # not a tile multiple -> exercises tail padding

    params = init_params(jax.random.PRNGKey(0), nb_users, nb_items,
                         mf_dim, mlp_layer_sizes)

    ku, ki = jax.random.split(jax.random.PRNGKey(0), 2)
    user = jax.random.randint(ku, (batch,), 0, nb_users, dtype=jnp.int32)
    item = jax.random.randint(ki, (batch,), 0, nb_items, dtype=jnp.int32)

    # Small block_rows for the demo so the grid has >1 step; use the default
    # (2048) for real workloads.
    out = neumf_pallas(params, user, item, sigmoid=True, block_rows=8)
    out = jax.block_until_ready(out)

    ref = neumf_reference(params, user, item, sigmoid=True)
    assert out.shape == (batch, 1)
    assert bool(jnp.all(jnp.isfinite(out)))
    assert bool(jnp.allclose(out, ref, atol=2e-2, rtol=2e-2)), (
        float(jnp.max(jnp.abs(out - ref))))

    print("KERNEL_OK")
</pallas_src>

<mosaic_0001>
module attributes {stable_mosaic.version = 11 : i64} {
  func.func @_neumf_kernel(%arg0: i32, %arg1: memref<8x40xbf16, #tpu.memory_space<vmem>>, %arg2: memref<8x40xbf16, #tpu.memory_space<vmem>>, %arg3: memref<64x32xbf16, #tpu.memory_space<vmem>>, %arg4: memref<1x32xf32, #tpu.memory_space<vmem>>, %arg5: memref<32x16xbf16, #tpu.memory_space<vmem>>, %arg6: memref<1x16xf32, #tpu.memory_space<vmem>>, %arg7: memref<16x8xbf16, #tpu.memory_space<vmem>>, %arg8: memref<1x8xf32, #tpu.memory_space<vmem>>, %arg9: memref<1x16xf32, #tpu.memory_space<vmem>>, %arg10: memref<1x1xf32, #tpu.memory_space<smem>>, %arg11: memref<1x1x8xf32, #tpu.memory_space<vmem>>) attributes {dimension_semantics = [#tpu.dimension_semantics<parallel>], iteration_bounds = array<i64: 2>, scalar_prefetch = 0 : i64, scratch_operands = 0 : i64, tpu.core_type = #tpu.core_type<tc>, window_params = [{transform_indices = @transform_0, window_bounds = array<i64: 8, 40>}, {transform_indices = @transform_1, window_bounds = array<i64: 8, 40>}, {pipeline_mode = #tpu.pipeline_mode<synchronous>, transform_indices = @transform_2, window_bounds = array<i64: 64, 32>}, {pipeline_mode = #tpu.pipeline_mode<synchronous>, transform_indices = @transform_3, window_bounds = array<i64: 1, 32>}, {pipeline_mode = #tpu.pipeline_mode<synchronous>, transform_indices = @transform_4, window_bounds = array<i64: 32, 16>}, {pipeline_mode = #tpu.pipeline_mode<synchronous>, transform_indices = @transform_5, window_bounds = array<i64: 1, 16>}, {pipeline_mode = #tpu.pipeline_mode<synchronous>, transform_indices = @transform_6, window_bounds = array<i64: 16, 8>}, {pipeline_mode = #tpu.pipeline_mode<synchronous>, transform_indices = @transform_7, window_bounds = array<i64: 1, 8>}, {pipeline_mode = #tpu.pipeline_mode<synchronous>, transform_indices = @transform_8, window_bounds = array<i64: 1, 16>}, {transform_indices = @transform_9, window_bounds = array<i64: 1, 1>}, {transform_indices = @transform_10, window_bounds = array<i64: 1, 1, 8>}]} {
    %c0 = arith.constant 0 : index
    %c0_0 = arith.constant 0 : index
    %0 = vector.load %arg1[%c0, %c0_0] : memref<8x40xbf16, #tpu.memory_space<vmem>>, vector<8x40xbf16>
    %c0_1 = arith.constant 0 : index
    %c0_2 = arith.constant 0 : index
    %1 = vector.load %arg2[%c0_1, %c0_2] : memref<8x40xbf16, #tpu.memory_space<vmem>>, vector<8x40xbf16>
    %2 = vector.extract_strided_slice %0 {offsets = [0, 0], sizes = [8, 8], strides = [1, 1]} : vector<8x40xbf16> to vector<8x8xbf16>
    %3 = arith.extf %2 : vector<8x8xbf16> to vector<8x8xf32>
    %4 = vector.extract_strided_slice %1 {offsets = [0, 0], sizes = [8, 8], strides = [1, 1]} : vector<8x40xbf16> to vector<8x8xbf16>
    %5 = arith.extf %4 : vector<8x8xbf16> to vector<8x8xf32>
    %6 = arith.mulf %3, %5 : vector<8x8xf32>
    %7 = vector.extract_strided_slice %0 {offsets = [0, 8], sizes = [8, 32], strides = [1, 1]} : vector<8x40xbf16> to vector<8x32xbf16>
    %8 = vector.extract_strided_slice %1 {offsets = [0, 8], sizes = [8, 32], strides = [1, 1]} : vector<8x40xbf16> to vector<8x32xbf16>
    %9 = tpu.concatenate %7, %8 in 1 : vector<8x32xbf16>, vector<8x32xbf16> -> vector<8x64xbf16>
    %c0_3 = arith.constant 0 : index
    %c0_4 = arith.constant 0 : index
    %10 = vector.load %arg3[%c0_3, %c0_4] : memref<64x32xbf16, #tpu.memory_space<vmem>>, vector<64x32xbf16>
    %cst = arith.constant dense<0.000000e+00> : vector<8x32xf32>
    %11 = tpu.matmul %9, %10, %cst {dimension_numbers = #tpu.dot_dimension_numbers<[1], [0], [0], [1], [0, 0, 1, 1], [], []>} : vector<8x64xbf16>, vector<64x32xbf16>, vector<8x32xf32> -> vector<8x32xf32>
    %c0_5 = arith.constant 0 : index
    %c0_6 = arith.constant 0 : index
    %12 = vector.load %arg4[%c0_5, %c0_6] : memref<1x32xf32, #tpu.memory_space<vmem>>, vector<1x32xf32>
    %13 = vector.broadcast %12 : vector<1x32xf32> to vector<8x32xf32>
    %14 = arith.addf %11, %13 : vector<8x32xf32>
    %cst_7 = arith.constant 0.000000e+00 : f32
    %15 = vector.broadcast %cst_7 : f32 to vector<8x32xf32>
    %16 = arith.maximumf %14, %15 : vector<8x32xf32>
    %17 = arith.truncf %16 : vector<8x32xf32> to vector<8x32xbf16>
    %c0_8 = arith.constant 0 : index
    %c0_9 = arith.constant 0 : index
    %18 = vector.load %arg5[%c0_8, %c0_9] : memref<32x16xbf16, #tpu.memory_space<vmem>>, vector<32x16xbf16>
    %cst_10 = arith.constant dense<0.000000e+00> : vector<8x16xf32>
    %19 = tpu.matmul %17, %18, %cst_10 {dimension_numbers = #tpu.dot_dimension_numbers<[1], [0], [0], [1], [0, 0, 1, 1], [], []>} : vector<8x32xbf16>, vector<32x16xbf16>, vector<8x16xf32> -> vector<8x16xf32>
    %c0_11 = arith.constant 0 : index
    %c0_12 = arith.constant 0 : index
    %20 = vector.load %arg6[%c0_11, %c0_12] : memref<1x16xf32, #tpu.memory_space<vmem>>, vector<1x16xf32>
    %21 = vector.broadcast %20 : vector<1x16xf32> to vector<8x16xf32>
    %22 = arith.addf %19, %21 : vector<8x16xf32>
    %cst_13 = arith.constant 0.000000e+00 : f32
    %23 = vector.broadcast %cst_13 : f32 to vector<8x16xf32>
    %24 = arith.maximumf %22, %23 : vector<8x16xf32>
    %25 = arith.truncf %24 : vector<8x16xf32> to vector<8x16xbf16>
    %c0_14 = arith.constant 0 : index
    %c0_15 = arith.constant 0 : index
    %26 = vector.load %arg7[%c0_14, %c0_15] : memref<16x8xbf16, #tpu.memory_space<vmem>>, vector<16x8xbf16>
    %cst_16 = arith.constant dense<0.000000e+00> : vector<8x8xf32>
    %27 = tpu.matmul %25, %26, %cst_16 {dimension_numbers = #tpu.dot_dimension_numbers<[1], [0], [0], [1], [0, 0, 1, 1], [], []>} : vector<8x16xbf16>, vector<16x8xbf16>, vector<8x8xf32> -> vector<8x8xf32>
    %c0_17 = arith.constant 0 : index
    %c0_18 = arith.constant 0 : index
    %28 = vector.load %arg8[%c0_17, %c0_18] : memref<1x8xf32, #tpu.memory_space<vmem>>, vector<1x8xf32>
    %29 = vector.broadcast %28 : vector<1x8xf32> to vector<8x8xf32>
    %30 = arith.addf %27, %29 : vector<8x8xf32>
    %cst_19 = arith.constant 0.000000e+00 : f32
    %31 = vector.broadcast %cst_19 : f32 to vector<8x8xf32>
    %32 = arith.maximumf %30, %31 : vector<8x8xf32>
    %33 = tpu.concatenate %6, %32 in 1 : vector<8x8xf32>, vector<8x8xf32> -> vector<8x16xf32>
    %34 = arith.truncf %33 : vector<8x16xf32> to vector<8x16xbf16>
    %c0_20 = arith.constant 0 : index
    %c0_21 = arith.constant 0 : index
    %35 = vector.load %arg9[%c0_20, %c0_21] : memref<1x16xf32, #tpu.memory_space<vmem>>, vector<1x16xf32>
    %36 = arith.truncf %35 : vector<1x16xf32> to vector<1x16xbf16>
    %cst_22 = arith.constant dense<0.000000e+00> : vector<1x8xf32>
    %37 = tpu.matmul %36, %34, %cst_22 {dimension_numbers = #tpu.dot_dimension_numbers<[1], [1], [0], [0], [0, 0, 1, 0], [], []>} : vector<1x16xbf16>, vector<8x16xbf16>, vector<1x8xf32> -> vector<1x8xf32>
    %c0_23 = arith.constant 0 : index
    %c0_24 = arith.constant 0 : index
    %38 = memref.load %arg10[%c0_23, %c0_24] : memref<1x1xf32, #tpu.memory_space<smem>>
    %39 = vector.broadcast %38 : f32 to vector<1x8xf32>
    %40 = arith.addf %37, %39 : vector<1x8xf32>
    %41 = arith.negf %40 : vector<1x8xf32>
    %42 = math.exp %41 : vector<1x8xf32>
    %cst_25 = arith.constant 1.000000e+00 : f32
    %43 = vector.broadcast %cst_25 : f32 to vector<1x8xf32>
    %44 = arith.addf %43, %42 : vector<1x8xf32>
    %45 = arith.divf %43, %44 : vector<1x8xf32>
    %46 = vector.shape_cast %45 : vector<1x8xf32> to vector<1x1x8xf32>
    %c0_26 = arith.constant 0 : index
    %c0_27 = arith.constant 0 : index
    %c0_28 = arith.constant 0 : index
    %47 = vector.load %arg11[%c0_26, %c0_27, %c0_28] : memref<1x1x8xf32, #tpu.memory_space<vmem>>, vector<1x1x8xf32>
    tpu.vector_store %arg11[%c0_26, %c0_27, %c0_28], %46 {strides = array<i32>} : memref<1x1x8xf32, #tpu.memory_space<vmem>>, vector<1x1x8xf32>,
    return
  }
  func.func @transform_0(%arg0: i32) -> (i32, i32) {
    %c0_i32 = arith.constant 0 : i32
    %c0_i32_0 = arith.constant 0 : i32
    return %arg0, %c0_i32 : i32, i32
  }
  func.func @transform_1(%arg0: i32) -> (i32, i32) {
    %c0_i32 = arith.constant 0 : i32
    %c0_i32_0 = arith.constant 0 : i32
    return %arg0, %c0_i32 : i32, i32
  }
  func.func @transform_2(%arg0: i32) -> (i32, i32) {
    %c0_i32 = arith.constant 0 : i32
    %c0_i32_0 = arith.constant 0 : i32
    %c0_i32_1 = arith.constant 0 : i32
    return %c0_i32, %c0_i32_0 : i32, i32
  }
  func.func @transform_3(%arg0: i32) -> (i32, i32) {
    %c0_i32 = arith.constant 0 : i32
    %c0_i32_0 = arith.constant 0 : i32
    %c0_i32_1 = arith.constant 0 : i32
    return %c0_i32, %c0_i32_0 : i32, i32
  }
  func.func @transform_4(%arg0: i32) -> (i32, i32) {
    %c0_i32 = arith.constant 0 : i32
    %c0_i32_0 = arith.constant 0 : i32
    %c0_i32_1 = arith.constant 0 : i32
    return %c0_i32, %c0_i32_0 : i32, i32
  }
  func.func @transform_5(%arg0: i32) -> (i32, i32) {
    %c0_i32 = arith.constant 0 : i32
    %c0_i32_0 = arith.constant 0 : i32
    %c0_i32_1 = arith.constant 0 : i32
    return %c0_i32, %c0_i32_0 : i32, i32
  }
  func.func @transform_6(%arg0: i32) -> (i32, i32) {
    %c0_i32 = arith.constant 0 : i32
    %c0_i32_0 = arith.constant 0 : i32
    %c0_i32_1 = arith.constant 0 : i32
    return %c0_i32, %c0_i32_0 : i32, i32
  }
  func.func @transform_7(%arg0: i32) -> (i32, i32) {
    %c0_i32 = arith.constant 0 : i32
    %c0_i32_0 = arith.constant 0 : i32
    %c0_i32_1 = arith.constant 0 : i32
    return %c0_i32, %c0_i32_0 : i32, i32
  }
  func.func @transform_8(%arg0: i32) -> (i32, i32) {
    %c0_i32 = arith.constant 0 : i32
    %c0_i32_0 = arith.constant 0 : i32
    %c0_i32_1 = arith.constant 0 : i32
    return %c0_i32, %c0_i32_0 : i32, i32
  }
  func.func @transform_9(%arg0: i32) -> (i32, i32) {
    %c0_i32 = arith.constant 0 : i32
    %c0_i32_0 = arith.constant 0 : i32
    %c0_i32_1 = arith.constant 0 : i32
    return %c0_i32, %c0_i32_0 : i32, i32
  }
  func.func @transform_10(%arg0: i32) -> (i32, i32, i32) {
    %c0_i32 = arith.constant 0 : i32
    %c0_i32_0 = arith.constant 0 : i32
    %c0_i32_1 = arith.constant 0 : i32
    return %arg0, %c0_i32, %c0_i32_0 : i32, i32, i32
  }
}

</mosaic_0001>

<llo_original>
// kernel: tpu_custom_call.1
$region0: #{tpu_custom_call.1}
  #allocation0 [shape = 'u32[]', space=smem, size = 0x4, offset = 0x4, fixed_abs, tag = 'smem constant byte address 0x4 - core index']
  #allocation1 [shape = 'u32[144,128]{1,0:T(1,128)}', space=vmem, size = 0x12000, scoped, tag = 'internal scratch']
  #allocation2 [shape = 'f32[1,1]{1,0:T(1,128)S(6)}', space=smem, size = 0x200, scoped, tag = 'scoped memory for tpu_custom_call.1']
  %s0 = inlined_call_operand.vmem [shape: bf16[16,40], index: 0, kind: input, shape index: {}]
  %s1 = inlined_call_operand.vmem [shape: bf16[16,40], index: 1, kind: input, shape index: {}]
  %s2 = inlined_call_operand.vmem [shape: bf16[64,32], index: 2, kind: input, shape index: {}]
  %s3 = inlined_call_operand.vmem [shape: f32[1,32], index: 3, kind: input, shape index: {}]
  %s4 = inlined_call_operand.vmem [shape: bf16[32,16], index: 4, kind: input, shape index: {}]
  %s5 = inlined_call_operand.vmem [shape: f32[1,16], index: 5, kind: input, shape index: {}]
  %s6 = inlined_call_operand.vmem [shape: bf16[16,8], index: 6, kind: input, shape index: {}]
  %s7 = inlined_call_operand.vmem [shape: f32[1,8], index: 7, kind: input, shape index: {}]
  %s8 = inlined_call_operand.vmem [shape: f32[1,16], index: 8, kind: input, shape index: {}]
  %s9 = inlined_call_operand.<no memory space> [shape: f32[1,1], index: 9, kind: input, shape index: {}]
  %s10 = inlined_call_operand.hbm [shape: f32[2,1,8], index: 10, kind: output, shape index: {}]
  %s11 = sld [smem:[#allocation0]]
  $region73: #{tpu_custom_call.1} parent=0
    _
  %s13 = ssub.s32 1, %s11
  %s14 = scalar_select 0, %s13, %s11
  %15 = sst [smem:[#allocation2]] %s9
  $region1: #{tpu_custom_call.1} parent=0
    #allocation3 [shape = 'u8[1024]{0}', space=vmem, size = 0x400, scoped, tag = 'output window, operand 0']
    #allocation4 [shape = 's32[2]{0}', space=sflag, size = 0x8, scoped, tag = 'scoped memory for tpu_custom_call.1']
    %16 = vsyncpa [#allocation4], 0
    %s17 = scalar_lea.sflag [#allocation4], 1
    %18 = vsyncpa %s17, 0
    loop: start=0, step=1, limit=4
    $region2: #{tpu_custom_call.1} parent=1 // loop_pre_header
      _
    $region3: #{tpu_custom_call.1} parent=1 // loop_header
      %s20 = sphi 0, %s24
      %p21 = scmp.ge.s32.totalorder %s20, 4
      %s30 = sphi 0, %s32
      %s33 = sphi 0, %s30
      %s34 = sphi 0, %s33
      %s50 = sphi 0, %s34
      %s56 = sphi 0, %s58
      %s59 = sphi 0, %s56
      %s60 = sphi 0, %s59
      %s76 = sphi 0, %s60
      %s80 = sphi 0, %s80
      %s82 = sphi 0, %s80
      %s83 = sphi 0, %s82
      %s97 = sphi 0, %s83
      %s101 = sphi 0, %s101
      %s103 = sphi 0, %s101
      %s104 = sphi 0, %s103
      %s118 = sphi 0, %s104
      %s122 = sphi 0, %s122
      %s124 = sphi 0, %s122
      %s125 = sphi 0, %s124
      %s139 = sphi 0, %s125
      %s143 = sphi 0, %s143
      %s145 = sphi 0, %s143
      %s146 = sphi 0, %s145
      %s160 = sphi 0, %s146
      %s164 = sphi 0, %s164
      %s166 = sphi 0, %s164
      %s167 = sphi 0, %s166
      %s181 = sphi 0, %s167
      %s185 = sphi 0, %s185
      %s187 = sphi 0, %s185
      %s188 = sphi 0, %s187
      %s202 = sphi 0, %s188
      %s206 = sphi 0, %s206
      %s208 = sphi 0, %s206
      %s209 = sphi 0, %s208
      %s223 = sphi 0, %s209
      %s227 = sphi 0, %s227
      %s229 = sphi 0, %s227
      %s230 = sphi 0, %s229
      %s244 = sphi 0, %s230
      %s250 = sphi 0, %s252
      %s253 = sphi 0, %s250
      %s254 = sphi 0, %s253
      %s270 = sphi 0, %s254
    $region4: #{tpu_custom_call.1} parent=1 // loop_header_branch
      %23 = sbr.rel (%p21) target = $region8
    $region5: #{tpu_custom_call.1} parent=1 // loop_body
      %s25 = ssub.s32 %s20, 1
      %s26 = ssub.s32 %s20, 2
      %s27 = sadd.s32 %s20, 1
      %s28 = ssub.s32 %s20, %s27
      %p29 = scmp.eq.s32.totalorder %s28, 0
      %s31 = sadd.s32 %s30, 1
      %s32 = scalar_select %p29, %s30, %s31
      %p35 = pneg %p29
      %p36 = scmp.eq.s32.totalorder %s20, 1
      %p37 = por %p35, %p36
      %p38 = scmp.ne.s32.totalorder %s30, %s33
      %p39 = scmp.eq.s32.totalorder %s20, 0
      %p40 = por %p38, %p39
      %p41 = scmp.ne.s32.totalorder %s30, %s33
      %p42 = scmp.eq.s32.totalorder %s25, 1
      %p43 = por %p41, %p42
      %p44 = scmp.ne.s32.totalorder %s33, %s34
      %p45 = scmp.eq.s32.totalorder %s25, 0
      %p46 = por %p44, %p45
      %p47 = scmp.ne.s32.totalorder %s33, %s34
      %p48 = scmp.eq.s32.totalorder %s26, 1
      %p49 = por %p47, %p48
      %p51 = scmp.ne.s32.totalorder %s34, %s50
      %p52 = scmp.eq.s32.totalorder %s26, 0
      %p53 = por %p51, %p52
      %s54 = ssub.s32 %s20, %s27
      %p55 = scmp.eq.s32.totalorder %s54, 0
      %s57 = sadd.s32 %s56, 1
      %s58 = scalar_select %p55, %s56, %s57
      %p61 = pneg %p55
      %p62 = scmp.eq.s32.totalorder %s20, 1
      %p63 = por %p61, %p62
      %p64 = scmp.ne.s32.totalorder %s56, %s59
      %p65 = scmp.eq.s32.totalorder %s20, 0
      %p66 = por %p64, %p65
      %p67 = scmp.ne.s32.totalorder %s56, %s59
      %p68 = scmp.eq.s32.totalorder %s25, 1
      %p69 = por %p67, %p68
      %p70 = scmp.ne.s32.totalorder %s59, %s60
      %p71 = scmp.eq.s32.totalorder %s25, 0
      %p72 = por %p70, %p71
      %p73 = scmp.ne.s32.totalorder %s59, %s60
      %p74 = scmp.eq.s32.totalorder %s26, 1
      %p75 = por %p73, %p74
      %p77 = scmp.ne.s32.totalorder %s60, %s76
      %p78 = scmp.eq.s32.totalorder %s26, 0
      %p79 = por %p77, %p78
      %s81 = sadd.s32 %s80, 1
      %p84 = scmp.eq.s32.totalorder %s20, 1
      %p85 = scmp.ne.s32.totalorder %s80, %s82
      %p86 = scmp.eq.s32.totalorder %s20, 0
      %p87 = por %p85, %p86
      %p88 = scmp.ne.s32.totalorder %s80, %s82
      %p89 = scmp.eq.s32.totalorder %s25, 1
      %p90 = por %p88, %p89
      %p91 = scmp.ne.s32.totalorder %s82, %s83
      %p92 = scmp.eq.s32.totalorder %s25, 0
      %p93 = por %p91, %p92
      %p94 = scmp.ne.s32.totalorder %s82, %s83
      %p95 = scmp.eq.s32.totalorder %s26, 1
      %p96 = por %p94, %p95
      %p98 = scmp.ne.s32.totalorder %s83, %s97
      %p99 = scmp.eq.s32.totalorder %s26, 0
      %p100 = por %p98, %p99
      %s102 = sadd.s32 %s101, 1
      %p105 = scmp.eq.s32.totalorder %s20, 1
      %p106 = scmp.ne.s32.totalorder %s101, %s103
      %p107 = scmp.eq.s32.totalorder %s20, 0
      %p108 = por %p106, %p107
      %p109 = scmp.ne.s32.totalorder %s101, %s103
      %p110 = scmp.eq.s32.totalorder %s25, 1
      %p111 = por %p109, %p110
      %p112 = scmp.ne.s32.totalorder %s103, %s104
      %p113 = scmp.eq.s32.totalorder %s25, 0
      %p114 = por %p112, %p113
      %p115 = scmp.ne.s32.totalorder %s103, %s104
      %p116 = scmp.eq.s32.totalorder %s26, 1
      %p117 = por %p115, %p116
      %p119 = scmp.ne.s32.totalorder %s104, %s118
      %p120 = scmp.eq.s32.totalorder %s26, 0
      %p121 = por %p119, %p120
      %s123 = sadd.s32 %s122, 1
      %p126 = scmp.eq.s32.totalorder %s20, 1
      %p127 = scmp.ne.s32.totalorder %s122, %s124
      %p128 = scmp.eq.s32.totalorder %s20, 0
      %p129 = por %p127, %p128
      %p130 = scmp.ne.s32.totalorder %s122, %s124
      %p131 = scmp.eq.s32.totalorder %s25, 1
      %p132 = por %p130, %p131
      %p133 = scmp.ne.s32.totalorder %s124, %s125
      %p134 = scmp.eq.s32.totalorder %s25, 0
      %p135 = por %p133, %p134
      %p136 = scmp.ne.s32.totalorder %s124, %s125
      %p137 = scmp.eq.s32.totalorder %s26, 1
      %p138 = por %p136, %p137
      %p140 = scmp.ne.s32.totalorder %s125, %s139
      %p141 = scmp.eq.s32.totalorder %s26, 0
      %p142 = por %p140, %p141
      %s144 = sadd.s32 %s143, 1
      %p147 = scmp.eq.s32.totalorder %s20, 1
      %p148 = scmp.ne.s32.totalorder %s143, %s145
      %p149 = scmp.eq.s32.totalorder %s20, 0
      %p150 = por %p148, %p149
      %p151 = scmp.ne.s32.totalorder %s143, %s145
      %p152 = scmp.eq.s32.totalorder %s25, 1
      %p153 = por %p151, %p152
      %p154 = scmp.ne.s32.totalorder %s145, %s146
      %p155 = scmp.eq.s32.totalorder %s25, 0
      %p156 = por %p154, %p155
      %p157 = scmp.ne.s32.totalorder %s145, %s146
      %p158 = scmp.eq.s32.totalorder %s26, 1
      %p159 = por %p157, %p158
      %p161 = scmp.ne.s32.totalorder %s146, %s160
      %p162 = scmp.eq.s32.totalorder %s26, 0
      %p163 = por %p161, %p162
      %s165 = sadd.s32 %s164, 1
      %p168 = scmp.eq.s32.totalorder %s20, 1
      %p169 = scmp.ne.s32.totalorder %s164, %s166
      %p170 = scmp.eq.s32.totalorder %s20, 0
      %p171 = por %p169, %p170
      %p172 = scmp.ne.s32.totalorder %s164, %s166
      %p173 = scmp.eq.s32.totalorder %s25, 1
      %p174 = por %p172, %p173
      %p175 = scmp.ne.s32.totalorder %s166, %s167
      %p176 = scmp.eq.s32.totalorder %s25, 0
      %p177 = por %p175, %p176
      %p178 = scmp.ne.s32.totalorder %s166, %s167
      %p179 = scmp.eq.s32.totalorder %s26, 1
      %p180 = por %p178, %p179
      %p182 = scmp.ne.s32.totalorder %s167, %s181
      %p183 = scmp.eq.s32.totalorder %s26, 0
      %p184 = por %p182, %p183
      %s186 = sadd.s32 %s185, 1
      %p189 = scmp.eq.s32.totalorder %s20, 1
      %p190 = scmp.ne.s32.totalorder %s185, %s187
      %p191 = scmp.eq.s32.totalorder %s20, 0
      %p192 = por %p190, %p191
      %p193 = scmp.ne.s32.totalorder %s185, %s187
      %p194 = scmp.eq.s32.totalorder %s25, 1
      %p195 = por %p193, %p194
      %p196 = scmp.ne.s32.totalorder %s187, %s188
      %p197 = scmp.eq.s32.totalorder %s25, 0
      %p198 = por %p196, %p197
      %p199 = scmp.ne.s32.totalorder %s187, %s188
      %p200 = scmp.eq.s32.totalorder %s26, 1
      %p201 = por %p199, %p200
      %p203 = scmp.ne.s32.totalorder %s188, %s202
      %p204 = scmp.eq.s32.totalorder %s26, 0
      %p205 = por %p203, %p204
      %s207 = sadd.s32 %s206, 1
      %p210 = scmp.eq.s32.totalorder %s20, 1
      %p211 = scmp.ne.s32.totalorder %s206, %s208
      %p212 = scmp.eq.s32.totalorder %s20, 0
      %p213 = por %p211, %p212
      %p214 = scmp.ne.s32.totalorder %s206, %s208
      %p215 = scmp.eq.s32.totalorder %s25, 1
      %p216 = por %p214, %p215
      %p217 = scmp.ne.s32.totalorder %s208, %s209
      %p218 = scmp.eq.s32.totalorder %s25, 0
      %p219 = por %p217, %p218
      %p220 = scmp.ne.s32.totalorder %s208, %s209
      %p221 = scmp.eq.s32.totalorder %s26, 1
      %p222 = por %p220, %p221
      %p224 = scmp.ne.s32.totalorder %s209, %s223
      %p225 = scmp.eq.s32.totalorder %s26, 0
      %p226 = por %p224, %p225
      %s228 = sadd.s32 %s227, 1
      %p231 = scmp.eq.s32.totalorder %s20, 1
      %p232 = scmp.ne.s32.totalorder %s227, %s229
      %p233 = scmp.eq.s32.totalorder %s20, 0
      %p234 = por %p232, %p233
      %p235 = scmp.ne.s32.totalorder %s227, %s229
      %p236 = scmp.eq.s32.totalorder %s25, 1
      %p237 = por %p235, %p236
      %p238 = scmp.ne.s32.totalorder %s229, %s230
      %p239 = scmp.eq.s32.totalorder %s25, 0
      %p240 = por %p238, %p239
      %p241 = scmp.ne.s32.totalorder %s229, %s230
      %p242 = scmp.eq.s32.totalorder %s26, 1
      %p243 = por %p241, %p242
      %p245 = scmp.ne.s32.totalorder %s230, %s244
      %p246 = scmp.eq.s32.totalorder %s26, 0
      %p247 = por %p245, %p246
      %s248 = ssub.s32 %s20, %s27
      %p249 = scmp.eq.s32.totalorder %s248, 0
      %s251 = sadd.s32 %s250, 1
      %s252 = scalar_select %p249, %s250, %s251
      %p255 = pneg %p249
      %p256 = scmp.eq.s32.totalorder %s20, 1
      %p257 = por %p255, %p256
      %p258 = scmp.ne.s32.totalorder %s250, %s253
      %p259 = scmp.eq.s32.totalorder %s20, 0
      %p260 = por %p258, %p259
      %p261 = scmp.ne.s32.totalorder %s250, %s253
      %p262 = scmp.eq.s32.totalorder %s25, 1
      %p263 = por %p261, %p262
      %p264 = scmp.ne.s32.totalorder %s253, %s254
      %p265 = scmp.eq.s32.totalorder %s25, 0
      %p266 = por %p264, %p265
      %p267 = scmp.ne.s32.totalorder %s253, %s254
      %p268 = scmp.eq.s32.totalorder %s26, 1
      %p269 = por %p267, %p268
      %p271 = scmp.ne.s32.totalorder %s254, %s270
      %p272 = scmp.eq.s32.totalorder %s26, 0
      %p273 = por %p271, %p272
      %p274 = scmp.le.s32.totalorder 1, %s20
      %p275 = scmp.lt.s32.totalorder %s20, 3
      %p276 = pnand %p274, %p275
      %p277 = pneg %p276
      // Predicated region
      $region9: #{tpu_custom_call.1} parent=5 // pred_check
        _
      $region10: #{tpu_custom_call.1} parent=5 // pred_check_branch
        %279 = sbr.rel (%p276) target = $region12
      $region11: #{tpu_custom_call.1} parent=5 // pred_region
        %s280 = ssub.s32 %s20, 1
        // Predicated region
        $region13: #{tpu_custom_call.1} parent=11 // pred_check
          %p281 = pneg %p93
        $region14: #{tpu_custom_call.1} parent=11 // pred_check_branch
          %283 = sbr.rel (%p281) target = $region16
        $region15: #{tpu_custom_call.1} parent=11 // pred_region
          _
        $region16: #{tpu_custom_call.1} parent=11 // pred_fallthru
          _
        // Predicated region
        $region17: #{tpu_custom_call.1} parent=11 // pred_check
          %p284 = pneg %p114
        $region18: #{tpu_custom_call.1} parent=11 // pred_check_branch
          %286 = sbr.rel (%p284) target = $region20
        $region19: #{tpu_custom_call.1} parent=11 // pred_region
          _
        $region20: #{tpu_custom_call.1} parent=11 // pred_fallthru
          _
        // Predicated region
        $region21: #{tpu_custom_call.1} parent=11 // pred_check
          %p287 = pneg %p135
        $region22: #{tpu_custom_call.1} parent=11 // pred_check_branch
          %289 = sbr.rel (%p287) target = $region24
        $region23: #{tpu_custom_call.1} parent=11 // pred_region
          _
        $region24: #{tpu_custom_call.1} parent=11 // pred_fallthru
          _
        // Predicated region
        $region25: #{tpu_custom_call.1} parent=11 // pred_check
          %p290 = pneg %p156
        $region26: #{tpu_custom_call.1} parent=11 // pred_check_branch
          %292 = sbr.rel (%p290) target = $region28
        $region27: #{tpu_custom_call.1} parent=11 // pred_region
          _
        $region28: #{tpu_custom_call.1} parent=11 // pred_fallthru
          _
        // Predicated region
        $region29: #{tpu_custom_call.1} parent=11 // pred_check
          %p293 = pneg %p177
        $region30: #{tpu_custom_call.1} parent=11 // pred_check_branch
          %295 = sbr.rel (%p293) target = $region32
        $region31: #{tpu_custom_call.1} parent=11 // pred_region
          _
        $region32: #{tpu_custom_call.1} parent=11 // pred_fallthru
          _
        // Predicated region
        $region33: #{tpu_custom_call.1} parent=11 // pred_check
          %p296 = pneg %p198
        $region34: #{tpu_custom_call.1} parent=11 // pred_check_branch
          %298 = sbr.rel (%p296) target = $region36
        $region35: #{tpu_custom_call.1} parent=11 // pred_region
          _
        $region36: #{tpu_custom_call.1} parent=11 // pred_fallthru
          _
        // Predicated region
        $region37: #{tpu_custom_call.1} parent=11 // pred_check
          %p299 = pneg %p219
        $region38: #{tpu_custom_call.1} parent=11 // pred_check_branch
          %301 = sbr.rel (%p299) target = $region40
        $region39: #{tpu_custom_call.1} parent=11 // pred_region
          _
        $region40: #{tpu_custom_call.1} parent=11 // pred_fallthru
          _
        // Predicated region
        $region41: #{tpu_custom_call.1} parent=11 // pred_check
          %p302 = pneg %p240
        $region42: #{tpu_custom_call.1} parent=11 // pred_check_branch
          %304 = sbr.rel (%p302) target = $region44
        $region43: #{tpu_custom_call.1} parent=11 // pred_region
          _
        $region44: #{tpu_custom_call.1} parent=11 // pred_fallthru
          _
      $region12: #{tpu_custom_call.1} parent=5 // pred_fallthru
        _
      %p305 = scmp.lt.s32.totalorder %s20, 2
      // Predicated region
      $region45: #{tpu_custom_call.1} parent=5 // pred_check
        %p306 = pneg %p305
      $region46: #{tpu_custom_call.1} parent=5 // pred_check_branch
        %308 = sbr.rel (%p306) target = $region48
      $region47: #{tpu_custom_call.1} parent=5 // pred_region
        // Predicated region
        $region49: #{tpu_custom_call.1} parent=47 // pred_check
          %p309 = pneg %p40
        $region50: #{tpu_custom_call.1} parent=47 // pred_check_branch
          %311 = sbr.rel (%p309) target = $region52
        $region51: #{tpu_custom_call.1} parent=47 // pred_region
          %p312 = scmp.lt.s32.totalorder %s20, 1
          %s313 = scalar_select %p312, %s20, 1
          %s314 = smul.addr %s313, 4
          %s315 = scalar_lea.vmem %s0, %s314
        $region52: #{tpu_custom_call.1} parent=47 // pred_fallthru
          _
        // Predicated region
        $region53: #{tpu_custom_call.1} parent=47 // pred_check
          %p316 = pneg %p66
        $region54: #{tpu_custom_call.1} parent=47 // pred_check_branch
          %318 = sbr.rel (%p316) target = $region56
        $region55: #{tpu_custom_call.1} parent=47 // pred_region
          %p319 = scmp.lt.s32.totalorder %s20, 1
          %s320 = scalar_select %p319, %s20, 1
          %s321 = smul.addr %s320, 4
          %s322 = scalar_lea.vmem %s1, %s321
        $region56: #{tpu_custom_call.1} parent=47 // pred_fallthru
          _
      $region48: #{tpu_custom_call.1} parent=5 // pred_fallthru
        _
      %p323 = scmp.le.s32.totalorder 1, %s20
      %p324 = scmp.lt.s32.totalorder %s20, 3
      %p325 = pnand %p323, %p324
      %p326 = pneg %p325
      // Predicated region
      $region57: #{tpu_custom_call.1} parent=5 // pred_check
        _
      $region58: #{tpu_custom_call.1} parent=5 // pred_check_branch
        %328 = sbr.rel (%p325) target = $region60
      $region59: #{tpu_custom_call.1} parent=5 // pred_region
        %s329 = ssub.s32 %s20, 1
        %p330 = scmp.lt.s32.totalorder %s25, 1
        %s331 = scalar_select %p330, %s25, 1
        %s332 = smul.addr %s331, 4
        %s333 = scalar_lea.vmem %s0, %s332
        %p334 = pneg %p46
        %p335 = pneg %p43
        %p336 = scmp.lt.s32.totalorder %s25, 1
        %s337 = scalar_select %p336, %s25, 1
        %s338 = smul.addr %s337, 4
        %s339 = scalar_lea.vmem %s1, %s338
        %p340 = pneg %p72
        %p341 = pneg %p69
        %p342 = pneg %p93
        %p343 = pneg %p90
        %p344 = pneg %p114
        %p345 = pneg %p111
        %p346 = pneg %p135
        %p347 = pneg %p132
        %p348 = pneg %p156
        %p349 = pneg %p153
        %p350 = pneg %p177
        %p351 = pneg %p174
        %p352 = pneg %p198
        %p353 = pneg %p195
        %p354 = pneg %p219
        %p355 = pneg %p216
        %p356 = pneg %p240
        %p357 = pneg %p237
        %p358 = pneg %p266
        %p359 = pneg %p263
        %s360 = sand.u32 %s253, 1
        %s361 = scalar_lea.sflag [#allocation4], %s360
        %s362 = sand.u32 %s253, 1
        %s363 = scalar_lea.vmem [#allocation3], %s362
        %p364 = scmp.lt.s32.totalorder %s25, 1
        %s365 = scalar_select %p364, %s25, 1
        %s366 = smul.addr %s365, 4
        %s367 = scalar_lea.vmem %s0, %s366
        %p368 = scmp.lt.s32.totalorder %s25, 1
        %s369 = scalar_select %p368, %s25, 1
        %s370 = smul.addr %s369, 4
        %s371 = scalar_lea.vmem %s1, %s370
        %v373 = vld [vmem:[%s367] sm:$0xf]
        %v374 = vld [vmem:[%s371] sm:$0xf]
        %v375 = vunpack.c.l.bf16 %v373
        %v376 = vunpack.c.l.bf16 %v374
        %v377 = vmul.f32 %v375, %v376
        %v379 = vunpack.c.l.b16 %v373
        %v380 = vpack.c.b16 %v379, %v379
        %381 = vrot.lane.b32.xlu0 %v380, 120
        %v382 = vpop.permute.xlu0 %381
        %v384 = vunpack.c.l.b16 %v374
        %v385 = vpack.c.b16 %v384, %v384
        %386 = vrot.lane.b32.xlu0 %v385, 24
        %v387 = vpop.permute.xlu0 %386
        %vm388 = vcmask 261120
        %v391 = vsel %vm388, %v382, %v387
        %v392 = vld [vmem:[%s2] sm:$0xf]
        %v393 = vld [vmem:[%s2 + $0x4] sm:$0xf]
        %v394 = vld [vmem:[%s2 + $0x8] sm:$0xf]
        %v395 = vld [vmem:[%s2 + $0xc] sm:$0xf]
        %v396 = vld [vmem:[%s2 + $0x10] sm:$0xf]
        %v397 = vld [vmem:[%s2 + $0x14] sm:$0xf]
        %v398 = vld [vmem:[%s2 + $0x18] sm:$0xf]
        %v399 = vld [vmem:[%s2 + $0x1c] sm:$0xf]
        %v400 = vld [vmem:[%s3] sm:$0x1]
        %v402 = vlaneseq
        %v403 = vshrl.u32 %v402, 7
        %v404 = vsub.s32 0, %v403
        %v405 = vrot.slane %v400, %v404
        %v415 = vunpack.c.l.b16 %v392
        %v416 = vunpack.c.l.b16 %v393
        %v417 = vunpack.c.l.b16 %v394
        %v418 = vunpack.c.l.b16 %v395
        %v419 = vunpack.c.l.b16 %v396
        %v420 = vunpack.c.l.b16 %v397
        %v421 = vunpack.c.l.b16 %v398
        %v422 = vunpack.c.l.b16 %v399
        %v423 = vpack.c.b16 %v416, %v415
        %v424 = vpack.c.b16 %v418, %v417
        %v425 = vpack.c.b16 %v420, %v419
        %v426 = vpack.c.b16 %v422, %v421
        %vm431 = vcmask 523264
        %v432 = vsel %vm431, %v391, 0
        %434 = vmatprep.subr.bf16.mxu0 0
        %435 = vmatpush1.bf16.msra.mxu0 0
        %436 = vmatprep.subr.bf16.mxu0 0
        %437 = vmatpush1.bf16.msra.mxu0 0
        %438 = vmatprep.subr.bf16.mxu0 0
        %439 = vmatpush1.bf16.msra.mxu0 0
        %440 = vmatprep.subr.bf16.mxu0 0
        %441 = vmatpush1.bf16.msra.mxu0 0
        %442 = vmatprep.subr.bf16.mxu0 0
        %443 = vmatpush1.bf16.msra.mxu0 %v426
        %444 = vmatprep.subr.bf16.mxu0 0
        %445 = vmatpush1.bf16.msra.mxu0 %v425
        %446 = vmatprep.subr.bf16.mxu0 0
        %447 = vmatpush1.bf16.msra.mxu0 %v424
        %448 = vmatprep.subr.bf16.mxu0 0
        %449 = vmatpush1.bf16.msra.mxu0 %v423
        %450 = vmatprep.subr.bf16.mxu0 0
        %451 = vmatpush2.bf16.msra.mxu0 0
        %452 = vmatprep.subr.bf16.mxu0 0
        %453 = vmatpush2.bf16.msra.mxu0 0
        %454 = vmatprep.subr.bf16.mxu0 0
        %455 = vmatpush2.bf16.msra.mxu0 0
        %456 = vmatprep.subr.bf16.mxu0 0
        %457 = vmatpush2.bf16.msra.mxu0 0
        %458 = vmatprep.subr.bf16.mxu0 0
        %459 = vmatpush2.bf16.msra.mxu0 0
        %460 = vmatprep.subr.bf16.mxu0 0
        %461 = vmatpush2.bf16.msra.mxu0 0
        %462 = vmatprep.subr.bf16.mxu0 0
        %463 = vmatpush2.bf16.msra.mxu0 0
        %464 = vmatprep.subr.bf16.mxu0 0
        %465 = vmatpush2.bf16.msra.mxu0 0
        %466 = vmatprep.mubr.bf16.mxu0 0
        %467 = vmatmul.mubr.bf16.gmra.mxu0 %v432
        %v468 = vpop.f32.mrf.mxu0
        %v469 = vadd.f32 %v405, %v468
        %v470 = vpop.f32.mrf.mxu0
        %v471 = vpop.f32.mrf.mxu0
        %v472 = vpop.f32.mrf.mxu0
        %473 = vdwg.mxu0
        %v474 = vmax.f32 %v469, 0.0
        %v475 = vpack.c.bf16 %v474, %v474
        %v476 = vld [vmem:[%s4] sm:$0xf]
        %v477 = vld [vmem:[%s4 + $0x4] sm:$0xf]
        %v478 = vld [vmem:[%s4 + $0x8] sm:$0xf]
        %v479 = vld [vmem:[%s4 + $0xc] sm:$0xf]
        %v480 = vld [vmem:[%s5] sm:$0x1]
        %v482 = vlaneseq
        %v483 = vshrl.u32 %v482, 7
        %v484 = vsub.s32 0, %v483
        %v485 = vrot.slane %v480, %v484
        %v491 = vunpack.c.l.b16 %v476
        %v492 = vunpack.c.l.b16 %v477
        %v493 = vunpack.c.l.b16 %v478
        %v494 = vunpack.c.l.b16 %v479
        %v495 = vpack.c.b16 %v492, %v491
        %v496 = vpack.c.b16 %v494, %v493
        %v500 = vsel %vm388, %v475, 0
        %502 = vmatprep.subr.bf16.mxu0 0
        %503 = vmatpush1.bf16.msra.mxu0 0
        %504 = vmatprep.subr.bf16.mxu0 0
        %505 = vmatpush1.bf16.msra.mxu0 0
        %506 = vmatprep.subr.bf16.mxu0 0
        %507 = vmatpush1.bf16.msra.mxu0 0
        %508 = vmatprep.subr.bf16.mxu0 0
        %509 = vmatpush1.bf16.msra.mxu0 0
        %510 = vmatprep.subr.bf16.mxu0 0
        %511 = vmatpush1.bf16.msra.mxu0 0
        %512 = vmatprep.subr.bf16.mxu0 0
        %513 = vmatpush1.bf16.msra.mxu0 0
        %514 = vmatprep.subr.bf16.mxu0 0
        %515 = vmatpush1.bf16.msra.mxu0 %v496
        %516 = vmatprep.subr.bf16.mxu0 0
        %517 = vmatpush1.bf16.msra.mxu0 %v495
        %518 = vmatprep.subr.bf16.mxu0 0
        %519 = vmatpush2.bf16.msra.mxu0 0
        %520 = vmatprep.subr.bf16.mxu0 0
        %521 = vmatpush2.bf16.msra.mxu0 0
        %522 = vmatprep.subr.bf16.mxu0 0
        %523 = vmatpush2.bf16.msra.mxu0 0
        %524 = vmatprep.subr.bf16.mxu0 0
        %525 = vmatpush2.bf16.msra.mxu0 0
        %526 = vmatprep.subr.bf16.mxu0 0
        %527 = vmatpush2.bf16.msra.mxu0 0
        %528 = vmatprep.subr.bf16.mxu0 0
        %529 = vmatpush2.bf16.msra.mxu0 0
        %530 = vmatprep.subr.bf16.mxu0 0
        %531 = vmatpush2.bf16.msra.mxu0 0
        %532 = vmatprep.subr.bf16.mxu0 0
        %533 = vmatpush2.bf16.msra.mxu0 0
        %534 = vmatprep.mubr.bf16.mxu0 0
        %535 = vmatmul.mubr.bf16.gmra.mxu0 %v500
        %v536 = vpop.f32.mrf.mxu0
        %v537 = vadd.f32 %v485, %v536
        %v538 = vpop.f32.mrf.mxu0
        %v539 = vpop.f32.mrf.mxu0
        %v540 = vpop.f32.mrf.mxu0
        %541 = vdwg.mxu0
        %v542 = vmax.f32 %v537, 0.0
        %v543 = vpack.c.bf16 %v542, %v542
        %v544 = vld [vmem:[%s6] sm:$0xf]
        %v545 = vld [vmem:[%s6 + $0x4] sm:$0xf]
        %v546 = vld [vmem:[%s7] sm:$0x1]
        %v548 = vlaneseq
        %v549 = vshrl.u32 %v548, 7
        %v550 = vsub.s32 0, %v549
        %v551 = vrot.slane %v546, %v550
        %v555 = vunpack.c.l.b16 %v544
        %v556 = vunpack.c.l.b16 %v545
        %v557 = vpack.c.b16 %v556, %v555
        %vm559 = vcmask 130048
        %v561 = vsel %vm559, %v543, 0
        %563 = vmatprep.subr.bf16.mxu0 0
        %564 = vmatpush1.bf16.msra.mxu0 0
        %565 = vmatprep.subr.bf16.mxu0 0
        %566 = vmatpush1.bf16.msra.mxu0 0
        %567 = vmatprep.subr.bf16.mxu0 0
        %568 = vmatpush1.bf16.msra.mxu0 0
        %569 = vmatprep.subr.bf16.mxu0 0
        %570 = vmatpush1.bf16.msra.mxu0 0
        %571 = vmatprep.subr.bf16.mxu0 0
        %572 = vmatpush1.bf16.msra.mxu0 0
        %573 = vmatprep.subr.bf16.mxu0 0
        %574 = vmatpush1.bf16.msra.mxu0 0
        %575 = vmatprep.subr.bf16.mxu0 0
        %576 = vmatpush1.bf16.msra.mxu0 0
        %577 = vmatprep.subr.bf16.mxu0 0
        %578 = vmatpush1.bf16.msra.mxu0 %v557
        %579 = vmatprep.subr.bf16.mxu0 0
        %580 = vmatpush2.bf16.msra.mxu0 0
        %581 = vmatprep.subr.bf16.mxu0 0
        %582 = vmatpush2.bf16.msra.mxu0 0
        %583 = vmatprep.subr.bf16.mxu0 0
        %584 = vmatpush2.bf16.msra.mxu0 0
        %585 = vmatprep.subr.bf16.mxu0 0
        %586 = vmatpush2.bf16.msra.mxu0 0
        %587 = vmatprep.subr.bf16.mxu0 0
        %588 = vmatpush2.bf16.msra.mxu0 0
        %589 = vmatprep.subr.bf16.mxu0 0
        %590 = vmatpush2.bf16.msra.mxu0 0
        %591 = vmatprep.subr.bf16.mxu0 0
        %592 = vmatpush2.bf16.msra.mxu0 0
        %593 = vmatprep.subr.bf16.mxu0 0
        %594 = vmatpush2.bf16.msra.mxu0 0
        %595 = vmatprep.mubr.bf16.mxu0 0
        %596 = vmatmul.mubr.bf16.gmra.mxu0 %v561
        %v597 = vpop.f32.mrf.mxu0
        %v598 = vadd.f32 %v551, %v597
        %v599 = vpop.f32.mrf.mxu0
        %v600 = vpop.f32.mrf.mxu0
        %v601 = vpop.f32.mrf.mxu0
        %602 = vdwg.mxu0
        %v603 = vmax.f32 %v598, 0.0
        %605 = vrot.lane.b32.xlu0 %v603, 8
        %v606 = vpop.permute.xlu0 %605
        %vm608 = vcmask 64512
        %v609 = vsel %vm608, %v377, %v606
        %v610 = vpack.c.bf16 %v609, %v609
        %v611 = vld [vmem:[%s8] sm:$0x1]
        %v612 = vpack.c.bf16 %v611, %v611
        %s613 = sld [smem:[#allocation2]]
        %v614 = vstv %s613
        %v616 = vsel %vm559, %v612, 0
        %v619 = vsel %vm559, %v610, 0
        %621 = vmatprep.subr.bf16.mxu0 0
        %622 = vmatpush1.bf16.xpose.msra.mxu0 0
        %623 = vmatprep.subr.bf16.mxu0 0
        %624 = vmatpush1.bf16.xpose.msra.mxu0 0
        %625 = vmatprep.subr.bf16.mxu0 0
        %626 = vmatpush1.bf16.xpose.msra.mxu0 0
        %627 = vmatprep.subr.bf16.mxu0 0
        %628 = vmatpush1.bf16.xpose.msra.mxu0 0
        %629 = vmatprep.subr.bf16.mxu0 0
        %630 = vmatpush1.bf16.xpose.msra.mxu0 0
        %631 = vmatprep.subr.bf16.mxu0 0
        %632 = vmatpush1.bf16.xpose.msra.mxu0 0
        %633 = vmatprep.subr.bf16.mxu0 0
        %634 = vmatpush1.bf16.xpose.msra.mxu0 0
        %635 = vmatprep.subr.bf16.mxu0 0
        %636 = vmatpush1.bf16.xpose.msra.mxu0 %v619
        %637 = vmatprep.subr.bf16.mxu0 0
        %638 = vmatpush2.bf16.xpose.msra.mxu0 0
        %639 = vmatprep.subr.bf16.mxu0 0
        %640 = vmatpush2.bf16.xpose.msra.mxu0 0
        %641 = vmatprep.subr.bf16.mxu0 0
        %642 = vmatpush2.bf16.xpose.msra.mxu0 0
        %643 = vmatprep.subr.bf16.mxu0 0
        %644 = vmatpush2.bf16.xpose.msra.mxu0 0
        %645 = vmatprep.subr.bf16.mxu0 0
        %646 = vmatpush2.bf16.xpose.msra.mxu0 0
        %647 = vmatprep.subr.bf16.mxu0 0
        %648 = vmatpush2.bf16.xpose.msra.mxu0 0
        %649 = vmatprep.subr.bf16.mxu0 0
        %650 = vmatpush2.bf16.xpose.msra.mxu0 0
        %651 = vmatprep.subr.bf16.mxu0 0
        %652 = vmatpush2.bf16.xpose.msra.mxu0 0
        %653 = vmatprep.mubr.bf16.mxu0 0
        %654 = vmatmul.mubr.bf16.gmra.mxu0 %v616
        %v655 = vpop.f32.mrf.mxu0
        %v656 = vadd.f32 %v614, %v655
        %v657 = vpop.f32.mrf.mxu0
        %v658 = vpop.f32.mrf.mxu0
        %v659 = vpop.f32.mrf.mxu0
        %660 = vdwg.mxu0
        %v661 = vxor.u32 %v656, 2147483648
        %v662 = vmul.f32 %v661, 1.442695
        %v663 = vpow.pop %v662
        %v664 = vadd.f32 %v663, 1.0
        %v665 = vrcp.pop %v664
        %v666 = vmul.f32 1.0, %v665
        %vm667 = vcmask 57344
        %668 = vst.msk [vmem:[%s363] sm:$0x1] %vm667, %v666
        %s669 = sand.u32 %s253, 1
        %s670 = scalar_lea.sflag [#allocation4], %s669
        %s671 = sand.u32 %s253, 1
        %s672 = scalar_lea.vmem [#allocation3], %s671
        // Predicated region
        $region61: #{tpu_custom_call.1} parent=59 // pred_check
          %p673 = pneg %p263
        $region62: #{tpu_custom_call.1} parent=59 // pred_check_branch
          %675 = sbr.rel (%p673) target = $region64
        $region63: #{tpu_custom_call.1} parent=59 // pred_region
          %s677 = ssub.s32 16, 16
          %678 = vsyncadd %s670, %s677
          %s679 = smul.addr %s25, 16
          %s680 = scalar_lea.hbm %s10, %s679
          %s682 = sshll.u32 %s672, 4
          %s683 = int_to_ptr.vmem [resolvable:$true] %s682
          %685 = dma.vmem_to_hbm [thread:$0]  %s683, 16, %s680, %s670
        $region64: #{tpu_custom_call.1} parent=59 // pred_fallthru
          _
      $region60: #{tpu_custom_call.1} parent=5 // pred_fallthru
        _
      %p686 = scmp.le.s32.totalorder 2, %s20
      // Predicated region
      $region65: #{tpu_custom_call.1} parent=5 // pred_check
        %p687 = pneg %p686
      $region66: #{tpu_custom_call.1} parent=5 // pred_check_branch
        %689 = sbr.rel (%p687) target = $region68
      $region67: #{tpu_custom_call.1} parent=5 // pred_region
        %s690 = ssub.s32 %s20, 2
        // Predicated region
        $region69: #{tpu_custom_call.1} parent=67 // pred_check
          %p691 = pneg %p269
        $region70: #{tpu_custom_call.1} parent=67 // pred_check_branch
          %693 = sbr.rel (%p691) target = $region72
        $region71: #{tpu_custom_call.1} parent=67 // pred_region
          %s694 = sand.u32 %s254, 1
          %s695 = scalar_lea.sflag [#allocation4], %s694
          %s696 = sand.u32 %s254, 1
          %s697 = scalar_lea.vmem [#allocation3], %s696
          %698 = dma.done %s695, 16
        $region72: #{tpu_custom_call.1} parent=67 // pred_fallthru
          _
      $region68: #{tpu_custom_call.1} parent=5 // pred_fallthru
        _
    $region6: #{tpu_custom_call.1} parent=1 // loop_footer
      %s24 = sadd.s32 1, %s20
    $region7: #{tpu_custom_call.1} parent=1 // loop_footer_branch
      %19 = sbr.rel target = $region3
    $region8: #{tpu_custom_call.1} parent=1 // loop_exit
      _
    %699 = vsyncpa [#allocation4], 1
    %s700 = scalar_lea.sflag [#allocation4], 1
    %701 = vsyncpa %s700, 1

</llo_original>
